<compile_context>
chip_gen: v7x
topology: tpu7x:2x2x1
jax: 0.10.0
libtpu: 0.0.40
codegen_flags: <defaults>
</compile_context>

<pallas_src>
import jax
import jax.numpy as jnp
from jax.experimental import pallas as pl
from jax.experimental.pallas import tpu as pltpu

_LANE = 128
_TARGET_TILE_HW = 1024  # lane-dense block width at production sizes (mult. of 128)


def _height_coord_kernel(x_ref, coord_ref, o_ref):
    # x_ref:     (1, C,   tile_hw)   lane-dense
    # coord_ref: (1, 1,   tile_hw)   lane-dense, already broadcast over W
    # o_ref:     (1, C+1, tile_hw)
    b, c, hw = x_ref.shape
    coord = jnp.broadcast_to(coord_ref[...], (b, 1, hw)).astype(o_ref.dtype)
    # One fused, full-extent store (no sublane-masked partial stores).
    o_ref[...] = jnp.concatenate([x_ref[...].astype(o_ref.dtype), coord], axis=1)


def height_coord(x: jax.Array, coord: jax.Array) -> jax.Array:
    """x: (B, C, H, W); coord: (1, 1, H, 1).  Returns (B, C+1, H, W)."""
    b, c, h, w = x.shape
    assert coord.shape == (1, 1, h, 1), "coord height must match input height"
    hw = h * w

    # Lane-dense trailing axis: pick a 128-aligned tile width and pad HW to it.
    if hw <= _TARGET_TILE_HW:
        tile_hw = pl.cdiv(hw, _LANE) * _LANE
    else:
        tile_hw = _TARGET_TILE_HW
    hw_pad = pl.cdiv(hw, tile_hw) * tile_hw
    n_hw = hw_pad // tile_hw

    # Wrapper-side layout plumbing (free): flatten spatial dims, broadcast the
    # coordinate over W, cast to the input dtype.
    x_flat = x.reshape(b, c, hw)
    coord_flat = (
        jnp.broadcast_to(coord, (1, 1, h, w)).reshape(1, 1, hw).astype(x.dtype)
    )
    if hw_pad != hw:
        pad = [(0, 0), (0, 0), (0, hw_pad - hw)]
        x_flat = jnp.pad(x_flat, pad)
        coord_flat = jnp.pad(coord_flat, pad)

    out_flat = pl.pallas_call(
        _height_coord_kernel,
        out_shape=jax.ShapeDtypeStruct((b, c + 1, hw_pad), x.dtype),
        grid_spec=pltpu.PrefetchScalarGridSpec(
            num_scalar_prefetch=0,
            grid=(b, n_hw),
            in_specs=[
                pl.BlockSpec((1, c, tile_hw), lambda bi, ti: (bi, 0, ti)),
                pl.BlockSpec((1, 1, tile_hw), lambda bi, ti: (0, 0, ti)),
            ],
            out_specs=pl.BlockSpec((1, c + 1, tile_hw), lambda bi, ti: (bi, 0, ti)),
        ),
        compiler_params=pltpu.CompilerParams(
            # Both axes independent: shards across v7x's 2 TensorCores;
            # measured no-op (but harmless) on single-TC v5e/v6e.
            dimension_semantics=("parallel", "parallel"),
        ),
    )(x_flat, coord_flat)

    if hw_pad != hw:
        out_flat = out_flat[..., :hw]
    return out_flat.reshape(b, c + 1, h, w)


if __name__ == "__main__":
    B, C, H, W = 2, 4, 16, 16

    key = jax.random.PRNGKey(0)
    x = jax.random.normal(key, (B, C, H, W), dtype=jnp.float32)

    # Deterministic parameter init: linspace(-1, 1, H) viewed as (1, 1, H, 1),
    # exactly as in the PyTorch __init__.
    coord_param = jnp.linspace(-1.0, 1.0, H, dtype=jnp.float32).reshape(1, 1, H, 1)

    out = height_coord(x, coord_param)
    out = jax.block_until_ready(out)

    # Reference check in plain JAX (mirrors the PyTorch forward).
    ref = jnp.concatenate(
        [x, jnp.broadcast_to(coord_param, (B, 1, H, W)).astype(x.dtype)], axis=1
    )
    assert out.shape == (B, C + 1, H, W)
    assert jnp.allclose(out, ref), "mismatch vs reference"

    print("KERNEL_OK")
</pallas_src>

<mosaic_0001>
module attributes {stable_mosaic.version = 11 : i64} {
  func.func @_height_coord_kernel(%arg0: i32, %arg1: i32, %arg2: memref<1x4x256xf32, #tpu.memory_space<vmem>>, %arg3: memref<1x1x256xf32, #tpu.memory_space<vmem>>, %arg4: memref<1x5x256xf32, #tpu.memory_space<vmem>>) attributes {dimension_semantics = [#tpu.dimension_semantics<parallel>, #tpu.dimension_semantics<parallel>], iteration_bounds = array<i64: 2, 1>, scalar_prefetch = 0 : i64, scratch_operands = 0 : i64, tpu.core_type = #tpu.core_type<tc>, window_params = [{transform_indices = @transform_0, window_bounds = array<i64: 1, 4, 256>}, {transform_indices = @transform_1, window_bounds = array<i64: 1, 1, 256>}, {transform_indices = @transform_2, window_bounds = array<i64: 1, 5, 256>}]} {
    %c0 = arith.constant 0 : index
    %c0_0 = arith.constant 0 : index
    %c0_1 = arith.constant 0 : index
    %0 = vector.load %arg3[%c0, %c0_0, %c0_1] : memref<1x1x256xf32, #tpu.memory_space<vmem>>, vector<1x1x256xf32>
    %c0_2 = arith.constant 0 : index
    %c0_3 = arith.constant 0 : index
    %c0_4 = arith.constant 0 : index
    %1 = vector.load %arg2[%c0_2, %c0_3, %c0_4] : memref<1x4x256xf32, #tpu.memory_space<vmem>>, vector<1x4x256xf32>
    %2 = tpu.concatenate %1, %0 in 1 : vector<1x4x256xf32>, vector<1x1x256xf32> -> vector<1x5x256xf32>
    %c0_5 = arith.constant 0 : index
    %c0_6 = arith.constant 0 : index
    %c0_7 = arith.constant 0 : index
    %3 = vector.load %arg4[%c0_5, %c0_6, %c0_7] : memref<1x5x256xf32, #tpu.memory_space<vmem>>, vector<1x5x256xf32>
    tpu.vector_store %arg4[%c0_5, %c0_6, %c0_7], %2 {strides = array<i32>} : memref<1x5x256xf32, #tpu.memory_space<vmem>>, vector<1x5x256xf32>,
    return
  }
  func.func @transform_0(%arg0: i32, %arg1: i32) -> (i32, i32, i32) {
    %c0_i32 = arith.constant 0 : i32
    %c0_i32_0 = arith.constant 0 : i32
    return %arg0, %c0_i32, %arg1 : i32, i32, i32
  }
  func.func @transform_1(%arg0: i32, %arg1: i32) -> (i32, i32, i32) {
    %c0_i32 = arith.constant 0 : i32
    %c0_i32_0 = arith.constant 0 : i32
    %c0_i32_1 = arith.constant 0 : i32
    return %c0_i32, %c0_i32_0, %arg1 : i32, i32, i32
  }
  func.func @transform_2(%arg0: i32, %arg1: i32) -> (i32, i32, i32) {
    %c0_i32 = arith.constant 0 : i32
    %c0_i32_0 = arith.constant 0 : i32
    return %arg0, %c0_i32, %arg1 : i32, i32, i32
  }
}

</mosaic_0001>

<llo_original>
// kernel: tpu_custom_call.1
$region0: #{tpu_custom_call.1}
  #allocation0 [shape = 'u32[]', space=smem, size = 0x4, offset = 0x4, fixed_abs, tag = 'smem constant byte address 0x4 - core index']
  #allocation1 [shape = 'u32[144,128]{1,0:T(1,128)}', space=vmem, size = 0x12000, scoped, tag = 'internal scratch']
  %s0 = inlined_call_operand.hbm [shape: f32[2,4,256], index: 0, kind: input, shape index: {}]
  %s1 = inlined_call_operand.vmem [shape: f32[1,1,256], index: 1, kind: input, shape index: {}]
  %s2 = inlined_call_operand.vmem [shape: f32[2,5,256], index: 2, kind: output, shape index: {}]
  %s3 = sld [smem:[#allocation0]]
  $region45: #{tpu_custom_call.1} parent=0
    _
  %s5 = ssub.s32 1, %s3
  %s6 = scalar_select 0, %s5, %s3
  $region1: #{tpu_custom_call.1} parent=0
    #allocation2 [shape = 'u8[8192]{0}', space=vmem, size = 0x2000, scoped, tag = 'input window, operand 0']
    #allocation3 [shape = 's32[2]{0}', space=sflag, size = 0x8, scoped, tag = 'scoped memory for tpu_custom_call.1']
    %7 = vsyncpa [#allocation3], 0
    %s8 = scalar_lea.sflag [#allocation3], 1
    %9 = vsyncpa %s8, 0
    loop: start=0, step=1, limit=4
    $region2: #{tpu_custom_call.1} parent=1 // loop_pre_header
      _
    $region3: #{tpu_custom_call.1} parent=1 // loop_header
      %s11 = sphi 0, %s15
      %p12 = scmp.ge.s32.totalorder %s11, 4
      %s18 = sphi 0, %s30
      %s19 = sphi 0, %s26
      %s20 = sphi 0, %s18
      %s21 = sphi 0, %s19
      %s22 = sphi 0, %s20
      %s23 = sphi 0, %s21
      %s35 = sphi 0, %s37
      %s38 = sphi 0, %s35
      %s39 = sphi 0, %s38
      %s55 = sphi 0, %s39
      %s61 = sphi 0, %s63
      %s64 = sphi 0, %s61
      %s65 = sphi 0, %s64
      %s81 = sphi 0, %s65
      %s89 = sphi 0, %s91
      %s92 = sphi 0, %s89
      %s93 = sphi 0, %s92
      %s109 = sphi 0, %s93
    $region4: #{tpu_custom_call.1} parent=1 // loop_header_branch
      %14 = sbr.rel (%p12) target = $region8
    $region5: #{tpu_custom_call.1} parent=1 // loop_body
      %s16 = ssub.s32 %s11, 1
      %s17 = ssub.s32 %s11, 2
      %s24 = sadd.s32 1, %s19
      %p25 = scmp.ge.s32.totalorder %s24, 1
      %s26 = scalar_select %p25, 0, %s24
      %s27 = sadd.s32 1, %s18
      %s28 = scalar_select %p25, %s27, %s18
      %p29 = scmp.ge.s32.totalorder %s28, 2
      %s30 = scalar_select %p29, 0, %s28
      %s31 = ssub.s32 %s18, %s30
      %s32 = ssub.s32 %s19, %s26
      %s33 = sor.u32 %s31, %s32
      %p34 = scmp.eq.s32.totalorder %s33, 0
      %s36 = sadd.s32 %s35, 1
      %s37 = scalar_select %p34, %s35, %s36
      %p40 = pneg %p34
      %p41 = scmp.eq.s32.totalorder %s11, 1
      %p42 = por %p40, %p41
      %p43 = scmp.ne.s32.totalorder %s35, %s38
      %p44 = scmp.eq.s32.totalorder %s11, 0
      %p45 = por %p43, %p44
      %p46 = scmp.ne.s32.totalorder %s35, %s38
      %p47 = scmp.eq.s32.totalorder %s16, 1
      %p48 = por %p46, %p47
      %p49 = scmp.ne.s32.totalorder %s38, %s39
      %p50 = scmp.eq.s32.totalorder %s16, 0
      %p51 = por %p49, %p50
      %p52 = scmp.ne.s32.totalorder %s38, %s39
      %p53 = scmp.eq.s32.totalorder %s17, 1
      %p54 = por %p52, %p53
      %p56 = scmp.ne.s32.totalorder %s39, %s55
      %p57 = scmp.eq.s32.totalorder %s17, 0
      %p58 = por %p56, %p57
      %s59 = ssub.s32 %s19, %s26
      %p60 = scmp.eq.s32.totalorder %s59, 0
      %s62 = sadd.s32 %s61, 1
      %s63 = scalar_select %p60, %s61, %s62
      %p66 = pneg %p60
      %p67 = scmp.eq.s32.totalorder %s11, 1
      %p68 = por %p66, %p67
      %p69 = scmp.ne.s32.totalorder %s61, %s64
      %p70 = scmp.eq.s32.totalorder %s11, 0
      %p71 = por %p69, %p70
      %p72 = scmp.ne.s32.totalorder %s61, %s64
      %p73 = scmp.eq.s32.totalorder %s16, 1
      %p74 = por %p72, %p73
      %p75 = scmp.ne.s32.totalorder %s64, %s65
      %p76 = scmp.eq.s32.totalorder %s16, 0
      %p77 = por %p75, %p76
      %p78 = scmp.ne.s32.totalorder %s64, %s65
      %p79 = scmp.eq.s32.totalorder %s17, 1
      %p80 = por %p78, %p79
      %p82 = scmp.ne.s32.totalorder %s65, %s81
      %p83 = scmp.eq.s32.totalorder %s17, 0
      %p84 = por %p82, %p83
      %s85 = ssub.s32 %s18, %s30
      %s86 = ssub.s32 %s19, %s26
      %s87 = sor.u32 %s85, %s86
      %p88 = scmp.eq.s32.totalorder %s87, 0
      %s90 = sadd.s32 %s89, 1
      %s91 = scalar_select %p88, %s89, %s90
      %p94 = pneg %p88
      %p95 = scmp.eq.s32.totalorder %s11, 1
      %p96 = por %p94, %p95
      %p97 = scmp.ne.s32.totalorder %s89, %s92
      %p98 = scmp.eq.s32.totalorder %s11, 0
      %p99 = por %p97, %p98
      %p100 = scmp.ne.s32.totalorder %s89, %s92
      %p101 = scmp.eq.s32.totalorder %s16, 1
      %p102 = por %p100, %p101
      %p103 = scmp.ne.s32.totalorder %s92, %s93
      %p104 = scmp.eq.s32.totalorder %s16, 0
      %p105 = por %p103, %p104
      %p106 = scmp.ne.s32.totalorder %s92, %s93
      %p107 = scmp.eq.s32.totalorder %s17, 1
      %p108 = por %p106, %p107
      %p110 = scmp.ne.s32.totalorder %s93, %s109
      %p111 = scmp.eq.s32.totalorder %s17, 0
      %p112 = por %p110, %p111
      %p113 = scmp.le.s32.totalorder 1, %s11
      %p114 = scmp.lt.s32.totalorder %s11, 3
      %p115 = pnand %p113, %p114
      %p116 = pneg %p115
      // Predicated region
      $region9: #{tpu_custom_call.1} parent=5 // pred_check
        _
      $region10: #{tpu_custom_call.1} parent=5 // pred_check_branch
        %118 = sbr.rel (%p115) target = $region12
      $region11: #{tpu_custom_call.1} parent=5 // pred_region
        %s119 = ssub.s32 %s11, 1
        // Predicated region
        $region13: #{tpu_custom_call.1} parent=11 // pred_check
          %p120 = pneg %p77
        $region14: #{tpu_custom_call.1} parent=11 // pred_check_branch
          %122 = sbr.rel (%p120) target = $region16
        $region15: #{tpu_custom_call.1} parent=11 // pred_region
          %s123 = smul.u32 2, %s21
          %p124 = scmp.lt.s32.totalorder %s123, 1
          %s125 = scalar_select %p124, %s123, 1
          %s126 = scalar_lea.vmem %s1, %s125
          %s127 = smul.u32 2, %s21
        $region16: #{tpu_custom_call.1} parent=11 // pred_fallthru
          _
      $region12: #{tpu_custom_call.1} parent=5 // pred_fallthru
        _
      %p128 = scmp.lt.s32.totalorder %s11, 2
      // Predicated region
      $region17: #{tpu_custom_call.1} parent=5 // pred_check
        %p129 = pneg %p128
      $region18: #{tpu_custom_call.1} parent=5 // pred_check_branch
        %131 = sbr.rel (%p129) target = $region20
      $region19: #{tpu_custom_call.1} parent=5 // pred_region
        // Predicated region
        $region21: #{tpu_custom_call.1} parent=19 // pred_check
          %p132 = pneg %p45
        $region22: #{tpu_custom_call.1} parent=19 // pred_check_branch
          %134 = sbr.rel (%p132) target = $region24
        $region23: #{tpu_custom_call.1} parent=19 // pred_region
          %s135 = sand.u32 %s35, 1
          %s136 = scalar_lea.sflag [#allocation3], %s135
          %s137 = sand.u32 %s35, 1
          %s138 = smul.addr %s137, 8
          %s139 = scalar_lea.vmem [#allocation2], %s138
          %s140 = smul.u32 2, %s19
          %s142 = ssub.s32 128, 128
          %143 = vsyncadd %s136, %s142
          %s144 = smul.addr %s18, 2
          %s145 = sadd.s32 %s140, %s144
          %s146 = smul.addr %s145, 64
          %s147 = scalar_lea.hbm %s0, %s146
          %s149 = sshll.u32 %s139, 4
          %s150 = int_to_ptr.vmem [resolvable:$true] %s149
          %152 = dma.hbm_to_vmem [thread:$0]  %s147, 128, %s150, %s136
        $region24: #{tpu_custom_call.1} parent=19 // pred_fallthru
          _
      $region20: #{tpu_custom_call.1} parent=5 // pred_fallthru
        _
      %p153 = scmp.le.s32.totalorder 1, %s11
      %p154 = scmp.lt.s32.totalorder %s11, 3
      %p155 = pnand %p153, %p154
      %p156 = pneg %p155
      // Predicated region
      $region25: #{tpu_custom_call.1} parent=5 // pred_check
        _
      $region26: #{tpu_custom_call.1} parent=5 // pred_check_branch
        %158 = sbr.rel (%p155) target = $region28
      $region27: #{tpu_custom_call.1} parent=5 // pred_region
        %s159 = ssub.s32 %s11, 1
        %s160 = sand.u32 %s38, 1
        %s161 = scalar_lea.sflag [#allocation3], %s160
        %s162 = sand.u32 %s38, 1
        %s163 = smul.addr %s162, 8
        %s164 = scalar_lea.vmem [#allocation2], %s163
        // Predicated region
        $region29: #{tpu_custom_call.1} parent=27 // pred_check
          %p165 = pneg %p51
        $region30: #{tpu_custom_call.1} parent=27 // pred_check_branch
          %167 = sbr.rel (%p165) target = $region32
        $region31: #{tpu_custom_call.1} parent=27 // pred_region
          %168 = dma.done %s161, 128
        $region32: #{tpu_custom_call.1} parent=27 // pred_fallthru
          _
        %s169 = sand.u32 %s38, 1
        %s170 = scalar_lea.sflag [#allocation3], %s169
        %s171 = sand.u32 %s38, 1
        %s172 = smul.addr %s171, 8
        %s173 = scalar_lea.vmem [#allocation2], %s172
        %p174 = pneg %p51
        %p175 = pneg %p48
        %s176 = smul.u32 2, %s21
        %p177 = scmp.lt.s32.totalorder %s176, 1
        %s178 = scalar_select %p177, %s176, 1
        %s179 = scalar_lea.vmem %s1, %s178
        %p180 = pneg %p77
        %p181 = pneg %p74
        %p182 = pneg %p105
        %p183 = pneg %p102
        %s184 = smul.u32 2, %s21
        %p185 = scmp.lt.s32.totalorder %s20, 1
        %s186 = scalar_select %p185, %s20, 1
        %p187 = scmp.lt.s32.totalorder %s184, 1
        %s188 = scalar_select %p187, %s184, 1
        %s189 = smul.addr %s186, 2
        %s190 = sadd.s32 %s188, %s189
        %s191 = smul.addr %s190, 8
        %s192 = scalar_lea.vmem %s2, %s191
        %s193 = smul.u32 2, %s21
        %s194 = smul.u32 2, %s21
        %p195 = scmp.lt.s32.totalorder %s194, 1
        %s196 = scalar_select %p195, %s194, 1
        %s197 = scalar_lea.vmem %s1, %s196
        %s198 = smul.u32 2, %s21
        %s199 = smul.u32 2, %s21
        %p200 = scmp.lt.s32.totalorder %s20, 1
        %s201 = scalar_select %p200, %s20, 1
        %p202 = scmp.lt.s32.totalorder %s199, 1
        %s203 = scalar_select %p202, %s199, 1
        %s204 = smul.addr %s201, 2
        %s205 = sadd.s32 %s203, %s204
        %s206 = smul.addr %s205, 8
        %s207 = scalar_lea.vmem %s2, %s206
        %s208 = smul.u32 2, %s21
        %v209 = vld [vmem:[%s197] sm:$0x3]
        %v210 = vld [vmem:[%s164] sm:$0xff]
        %v212 = vcombine.high %v210, %v210
        %v215 = vlaneseq
        %v216 = vshrl.u32 %v215, 7
        %v217 = vsub.s32 0, %v216
        %v218 = vrot.slane %v209, %v217
        %v219 = vlaneseq
        %v220 = vshrl.u32 %v219, 7
        %v221 = vsub.s32 1, %v220
        %v222 = vrot.slane %v209, %v221
        %vm225 = vcmask 1043456
        %v226 = vsel %vm225, %v210, %v218
        %v227 = vsel %vm225, %v212, %v222
        %228 = vst [vmem:[%s207] sm:$0x1f] %v226
        %229 = vst [vmem:[%s207 + $0x8] sm:$0x1f] %v227
        %s230 = smul.u32 2, %s21
        %p231 = scmp.lt.s32.totalorder %s20, 1
        %s232 = scalar_select %p231, %s20, 1
        %p233 = scmp.lt.s32.totalorder %s230, 1
        %s234 = scalar_select %p233, %s230, 1
        %s235 = smul.addr %s232, 2
        %s236 = sadd.s32 %s234, %s235
        %s237 = smul.addr %s236, 8
        %s238 = scalar_lea.vmem %s2, %s237
        // Predicated region
        $region33: #{tpu_custom_call.1} parent=27 // pred_check
          %p239 = pneg %p102
        $region34: #{tpu_custom_call.1} parent=27 // pred_check_branch
          %241 = sbr.rel (%p239) target = $region36
        $region35: #{tpu_custom_call.1} parent=27 // pred_region
          %s242 = smul.u32 2, %s21
        $region36: #{tpu_custom_call.1} parent=27 // pred_fallthru
          _
      $region28: #{tpu_custom_call.1} parent=5 // pred_fallthru
        _
      %p243 = scmp.le.s32.totalorder 2, %s11
      // Predicated region
      $region37: #{tpu_custom_call.1} parent=5 // pred_check
        %p244 = pneg %p243
      $region38: #{tpu_custom_call.1} parent=5 // pred_check_branch
        %246 = sbr.rel (%p244) target = $region40
      $region39: #{tpu_custom_call.1} parent=5 // pred_region
        %s247 = ssub.s32 %s11, 2
        // Predicated region
        $region41: #{tpu_custom_call.1} parent=39 // pred_check
          %p248 = pneg %p108
        $region42: #{tpu_custom_call.1} parent=39 // pred_check_branch
          %250 = sbr.rel (%p248) target = $region44
        $region43: #{tpu_custom_call.1} parent=39 // pred_region
          %s251 = smul.u32 2, %s23
          %p252 = scmp.lt.s32.totalorder %s22, 1
          %s253 = scalar_select %p252, %s22, 1
          %p254 = scmp.lt.s32.totalorder %s251, 1
          %s255 = scalar_select %p254, %s251, 1
          %s256 = smul.addr %s253, 2
          %s257 = sadd.s32 %s255, %s256
          %s258 = smul.addr %s257, 8
          %s259 = scalar_lea.vmem %s2, %s258
        $region44: #{tpu_custom_call.1} parent=39 // pred_fallthru
          _
      $region40: #{tpu_custom_call.1} parent=5 // pred_fallthru
        _
    $region6: #{tpu_custom_call.1} parent=1 // loop_footer
      %s15 = sadd.s32 1, %s11
    $region7: #{tpu_custom_call.1} parent=1 // loop_footer_branch
      %10 = sbr.rel target = $region3
    $region8: #{tpu_custom_call.1} parent=1 // loop_exit
      _
    %260 = vsyncpa [#allocation3], 1
    %s261 = scalar_lea.sflag [#allocation3], 1
    %262 = vsyncpa %s261, 1

</llo_original>
